<compile_context>
chip_gen: v6e
topology: v6e:2x2x1
jax: 0.10.0
libtpu: 0.0.40
codegen_flags: <defaults>
</compile_context>

<pallas_src>
import functools

import jax
import jax.numpy as jnp
from jax.experimental import pallas as pl
from jax.experimental.pallas import tpu as pltpu


def _round_up(n: int, m: int) -> int:
    return ((n + m - 1) // m) * m


def _num_tensorcores_per_device() -> int:
    """2 for v7x / megacore-style devices, 1 for v5e / v6e."""
    try:
        kind = jax.devices()[0].device_kind.lower().replace(" ", "")
    except Exception:
        return 1
    for tag in ("v4", "v5p", "7"):
        if tag in kind:
            return 2
    return 1


def _vmem_limit_bytes() -> int:
    """~75% of physical VMEM, capped at 96 MiB (=> ~48 MiB on v7x, 96 MiB on v5e/v6e)."""
    cap = 128 * 1024 * 1024
    try:
        cap = int(pltpu.get_tpu_info().vmem_capacity_bytes)
    except Exception:
        pass
    return max(32 * 1024 * 1024, min(96 * 1024 * 1024, (cap * 3) // 4))


def _clip_converter_kernel(x_ref, w1_ref, b1_ref, w2t_ref, b2_ref, o_ref, t_ref,
                           *, bt, st_tile, e_p):
    # x_ref:   (S_p, bt*E_p)        bf16  - bt batch elements fused along lanes
    # w1_ref:  (st_tile, S_p)       bf16  - linear1 weight rows for this S_t tile
    # b1_ref:  (st_tile, 1)         f32
    # w2t_ref: (E_p, E_t_p)         bf16  - linear2 weight, pre-transposed in wrapper
    # b2_ref:  (1, E_t_p)           f32
    # o_ref:   (bt, st_tile, E_t_p)
    # t_ref:   (bt*st_tile, E_p)    bf16  - VMEM scratch for the restacked intermediate

    # ---- linear1: one MXU call for the whole batch tile -------------------
    #   t[r, i*E_p + e] = sum_s W1[r, s] * x[s, i*E_p + e] + b1[r]
    t = jnp.dot(w1_ref[...], x_ref[...], preferred_element_type=jnp.float32)
    t = (t + b1_ref[...]).astype(jnp.bfloat16)          # bias broadcast once per step

    if bt == 1:
        t2 = t                                           # (st_tile, E_p)
    else:
        # Restack per-batch lane slabs along sublanes.  Slices are static,
        # 128-lane aligned (E_p % 128 == 0) and 8/16-sublane aligned
        # (st_tile % 16 == 0), so these are pure dense copies.
        for i in range(bt):                              # static unroll, bt small
            t_ref[pl.ds(i * st_tile, st_tile), :] = t[:, i * e_p:(i + 1) * e_p]
        t2 = t_ref[...]                                  # (bt*st_tile, E_p)

    # ---- linear2: one MXU call for the whole batch tile -------------------
    out = jnp.dot(t2, w2t_ref[...], preferred_element_type=jnp.float32)
    out = out + b2_ref[...]                              # bias added once per step

    for i in range(bt):                                  # dense (st_tile, E_t_p) slab stores
        o_ref[i] = out[i * st_tile:(i + 1) * st_tile, :].astype(o_ref.dtype)


def clip_converter(x, w1, b1, w2, b2, *, batch_tile=8, out_dtype=None):
    """Fused CLIPConverter forward.

    x:  (B, S, E)
    w1: (S_t, S), b1: (S_t,)   -- torch Linear(clip_seq -> clip_text_seq) params
    w2: (E_t, E), b2: (E_t,)   -- torch Linear(clip_emb -> clip_text_emb) params
    returns (B, S_t, E_t).  Pass out_dtype=jnp.bfloat16 to halve HBM writeback
    if the consumer tolerates it.
    """
    B, S, E = x.shape
    S_t, S_in = w1.shape
    E_t, E_in = w2.shape
    assert S_in == S and E_in == E
    out_dtype = out_dtype or x.dtype

    multi_tc = _num_tensorcores_per_device() >= 2

    # Batch tile: amortize per-step overhead.  Only on 2-TC devices do we keep
    # at least 2 parallel grid steps (either along batch or along S_t).
    bt = max(1, min(batch_tile, B))
    if multi_tc and B >= 2:
        bt = max(1, min(bt, (B + 1) // 2))
    B_p = _round_up(B, bt)
    n_b = B_p // bt
    n_st = 2 if (multi_tc and n_b < 2) else 1

    # Padding: seq dims to multiples of 16 (bf16 sublane packing), emb dims to
    # multiples of 128 (lane alignment).  Exact: zero contraction rows/cols,
    # padded output rows/cols/batches are sliced off below.
    S_p = _round_up(S, 16)
    S_t_p = _round_up(S_t, 16 * n_st)
    st_tile = S_t_p // n_st
    E_p = _round_up(E, 128)
    E_t_p = _round_up(E_t, 128)

    bf16, f32 = jnp.bfloat16, jnp.float32

    # x -> (S_p, B_p*E_p): batch fused along lanes so linear1 is one matmul.
    x_pad = jnp.pad(x.astype(bf16), ((0, B_p - B), (0, S_p - S), (0, E_p - E)))
    x_pp = jnp.transpose(x_pad, (1, 0, 2)).reshape(S_p, B_p * E_p)

    w1_p = jnp.pad(w1.astype(bf16), ((0, S_t_p - S_t), (0, S_p - S)))
    b1_p = jnp.pad(b1.astype(f32), (0, S_t_p - S_t)).reshape(S_t_p, 1)
    # Transpose W2 once, outside the kernel.
    w2t = jnp.pad(w2.astype(bf16), ((0, E_t_p - E_t), (0, E_p - E))).T    # (E_p, E_t_p)
    b2_r = jnp.pad(b2.astype(f32), (0, E_t_p - E_t)).reshape(1, E_t_p)

    kernel = functools.partial(_clip_converter_kernel, bt=bt, st_tile=st_tile, e_p=E_p)

    out_p = pl.pallas_call(
        kernel,
        out_shape=jax.ShapeDtypeStruct((B_p, S_t_p, E_t_p), out_dtype),
        grid_spec=pltpu.PrefetchScalarGridSpec(
            num_scalar_prefetch=0,
            grid=(n_b, n_st),
            in_specs=[
                pl.BlockSpec((S_p, bt * E_p), lambda b, s: (0, b)),
                pl.BlockSpec((st_tile, S_p), lambda b, s: (s, 0)),
                pl.BlockSpec((st_tile, 1), lambda b, s: (s, 0)),
                pl.BlockSpec((E_p, E_t_p), lambda b, s: (0, 0)),
                pl.BlockSpec((1, E_t_p), lambda b, s: (0, 0)),
            ],
            out_specs=pl.BlockSpec((bt, st_tile, E_t_p), lambda b, s: (b, s, 0)),
            scratch_shapes=[pltpu.VMEM((bt * st_tile, E_p), bf16)],
        ),
        compiler_params=pltpu.CompilerParams(
            dimension_semantics=("parallel", "parallel"),
            vmem_limit_bytes=_vmem_limit_bytes(),
        ),
    )(x_pp, w1_p, b1_p, w2t, b2_r)

    return out_p[:B, :S_t, :E_t]


def _reference(x, w1, b1, w2, b2):
    # Pure-JAX reference reproducing the PyTorch permute/linear/permute chain,
    # with the same bf16-input / f32-accumulate quantization as the kernel.
    f32, bf16 = jnp.float32, jnp.bfloat16
    xb = x.astype(bf16).astype(f32)
    w1b = w1.astype(bf16).astype(f32)
    w2b = w2.astype(bf16).astype(f32)
    xp = jnp.transpose(xb, (0, 2, 1))                   # (B, E, S)
    t = jnp.einsum("bes,ts->bet", xp, w1b) + b1         # (B, E, S_t)
    tp = jnp.transpose(t, (0, 2, 1))                    # (B, S_t, E)
    tp = tp.astype(bf16).astype(f32)
    return jnp.einsum("bse,fe->bsf", tp, w2b) + b2      # (B, S_t, E_t)


if __name__ == "__main__":
    # Small shapes consistent with the module (real: clip_seq=257, clip_emb=768,
    # clip_text_seq=257, clip_text_emb=1024).  Using 9 for the seq dims keeps
    # the "not a multiple of 8/16" character of 257; 32/64 for the emb dims
    # exercise the lane-padding path (real dims are already 128-multiples).
    B = 2
    clip_seq_dim = 9         # linear1 in_features
    clip_emb_dim = 32        # linear2 in_features
    clip_text_seq_dim = 9    # linear1 out_features
    clip_text_emb_dim = 64   # linear2 out_features

    key = jax.random.PRNGKey(0)
    kx, kw1, kb1, kw2, kb2 = jax.random.split(key, 5)

    x = jax.random.normal(kx, (B, clip_seq_dim, clip_emb_dim), dtype=jnp.float32)
    w1 = jax.random.normal(kw1, (clip_text_seq_dim, clip_seq_dim), dtype=jnp.float32) * 0.05
    b1 = jax.random.normal(kb1, (clip_text_seq_dim,), dtype=jnp.float32) * 0.05
    w2 = jax.random.normal(kw2, (clip_text_emb_dim, clip_emb_dim), dtype=jnp.float32) * 0.05
    b2 = jax.random.normal(kb2, (clip_text_emb_dim,), dtype=jnp.float32) * 0.05

    # Multi-batch path.
    out = jax.block_until_ready(clip_converter(x, w1, b1, w2, b2))
    ref = _reference(x, w1, b1, w2, b2)
    assert out.shape == (B, clip_text_seq_dim, clip_text_emb_dim)
    assert jnp.allclose(out, ref, atol=2e-3, rtol=2e-2), float(jnp.max(jnp.abs(out - ref)))

    # B == 1 path (S_t split across the second grid axis on 2-TC chips).
    out1 = jax.block_until_ready(clip_converter(x[:1], w1, b1, w2, b2))
    ref1 = _reference(x[:1], w1, b1, w2, b2)
    assert out1.shape == (1, clip_text_seq_dim, clip_text_emb_dim)
    assert jnp.allclose(out1, ref1, atol=2e-3, rtol=2e-2), float(jnp.max(jnp.abs(out1 - ref1)))

    # Ragged-batch path (B % bt != 0 -> padded batch computed then sliced off).
    x5 = jax.random.normal(kx, (5, clip_seq_dim, clip_emb_dim), dtype=jnp.float32)
    out5 = jax.block_until_ready(clip_converter(x5, w1, b1, w2, b2, batch_tile=2))
    ref5 = _reference(x5, w1, b1, w2, b2)
    assert out5.shape == (5, clip_text_seq_dim, clip_text_emb_dim)
    assert jnp.allclose(out5, ref5, atol=2e-3, rtol=2e-2), float(jnp.max(jnp.abs(out5 - ref5)))

    print("KERNEL_OK")
</pallas_src>

<mosaic_0001>
module attributes {stable_mosaic.version = 11 : i64} {
  func.func @_clip_converter_kernel(%arg0: i32, %arg1: i32, %arg2: memref<16x256xbf16, #tpu.memory_space<vmem>>, %arg3: memref<16x16xbf16, #tpu.memory_space<vmem>>, %arg4: memref<16x1xf32, #tpu.memory_space<vmem>>, %arg5: memref<128x128xbf16, #tpu.memory_space<vmem>>, %arg6: memref<1x128xf32, #tpu.memory_space<vmem>>, %arg7: memref<2x16x128xf32, #tpu.memory_space<vmem>>, %arg8: memref<32x128xbf16, #tpu.memory_space<vmem>>) attributes {dimension_semantics = [#tpu.dimension_semantics<parallel>, #tpu.dimension_semantics<parallel>], iteration_bounds = array<i64: 1, 1>, scalar_prefetch = 0 : i64, scratch_operands = 1 : i64, tpu.core_type = #tpu.core_type<tc>, window_params = [{transform_indices = @transform_0, window_bounds = array<i64: 16, 256>}, {transform_indices = @transform_1, window_bounds = array<i64: 16, 16>}, {transform_indices = @transform_2, window_bounds = array<i64: 16, 1>}, {pipeline_mode = #tpu.pipeline_mode<synchronous>, transform_indices = @transform_3, window_bounds = array<i64: 128, 128>}, {pipeline_mode = #tpu.pipeline_mode<synchronous>, transform_indices = @transform_4, window_bounds = array<i64: 1, 128>}, {transform_indices = @transform_5, window_bounds = array<i64: 2, 16, 128>}]} {
    %c0 = arith.constant 0 : index
    %c0_0 = arith.constant 0 : index
    %0 = vector.load %arg3[%c0, %c0_0] : memref<16x16xbf16, #tpu.memory_space<vmem>>, vector<16x16xbf16>
    %c0_1 = arith.constant 0 : index
    %c0_2 = arith.constant 0 : index
    %1 = vector.load %arg2[%c0_1, %c0_2] : memref<16x256xbf16, #tpu.memory_space<vmem>>, vector<16x256xbf16>
    %cst = arith.constant dense<0.000000e+00> : vector<16x256xf32>
    %2 = tpu.matmul %0, %1, %cst {dimension_numbers = #tpu.dot_dimension_numbers<[1], [0], [0], [1], [0, 0, 1, 1], [], []>} : vector<16x16xbf16>, vector<16x256xbf16>, vector<16x256xf32> -> vector<16x256xf32>
    %c0_3 = arith.constant 0 : index
    %c0_4 = arith.constant 0 : index
    %3 = vector.load %arg4[%c0_3, %c0_4] : memref<16x1xf32, #tpu.memory_space<vmem>>, vector<16x1xf32>
    %4 = vector.broadcast %3 : vector<16x1xf32> to vector<16x256xf32>
    %5 = arith.addf %2, %4 : vector<16x256xf32>
    %6 = arith.truncf %5 : vector<16x256xf32> to vector<16x256xbf16>
    %7 = vector.extract_strided_slice %6 {offsets = [0, 0], sizes = [16, 128], strides = [1, 1]} : vector<16x256xbf16> to vector<16x128xbf16>
    %c0_5 = arith.constant 0 : index
    %c0_6 = arith.constant 0 : index
    %8 = vector.load %arg8[%c0_5, %c0_6] : memref<32x128xbf16, #tpu.memory_space<vmem>>, vector<16x128xbf16>
    tpu.vector_store %arg8[%c0_5, %c0_6], %7 {strides = array<i32>} : memref<32x128xbf16, #tpu.memory_space<vmem>>, vector<16x128xbf16>,
    %9 = vector.extract_strided_slice %6 {offsets = [0, 128], sizes = [16, 128], strides = [1, 1]} : vector<16x256xbf16> to vector<16x128xbf16>
    %c16 = arith.constant 16 : index
    %c0_7 = arith.constant 0 : index
    %10 = vector.load %arg8[%c16, %c0_7] : memref<32x128xbf16, #tpu.memory_space<vmem>>, vector<16x128xbf16>
    tpu.vector_store %arg8[%c16, %c0_7], %9 {strides = array<i32>} : memref<32x128xbf16, #tpu.memory_space<vmem>>, vector<16x128xbf16>,
    %c0_8 = arith.constant 0 : index
    %c0_9 = arith.constant 0 : index
    %11 = vector.load %arg8[%c0_8, %c0_9] : memref<32x128xbf16, #tpu.memory_space<vmem>>, vector<32x128xbf16>
    %c0_10 = arith.constant 0 : index
    %c0_11 = arith.constant 0 : index
    %12 = vector.load %arg5[%c0_10, %c0_11] : memref<128x128xbf16, #tpu.memory_space<vmem>>, vector<128x128xbf16>
    %cst_12 = arith.constant dense<0.000000e+00> : vector<32x128xf32>
    %13 = tpu.matmul %11, %12, %cst_12 {dimension_numbers = #tpu.dot_dimension_numbers<[1], [0], [0], [1], [0, 0, 1, 1], [], []>} : vector<32x128xbf16>, vector<128x128xbf16>, vector<32x128xf32> -> vector<32x128xf32>
    %c0_13 = arith.constant 0 : index
    %c0_14 = arith.constant 0 : index
    %14 = vector.load %arg6[%c0_13, %c0_14] : memref<1x128xf32, #tpu.memory_space<vmem>>, vector<1x128xf32>
    %15 = vector.broadcast %14 : vector<1x128xf32> to vector<32x128xf32>
    %16 = arith.addf %13, %15 : vector<32x128xf32>
    %17 = vector.extract_strided_slice %16 {offsets = [0, 0], sizes = [16, 128], strides = [1, 1]} : vector<32x128xf32> to vector<16x128xf32>
    %c0_15 = arith.constant 0 : index
    %c0_16 = arith.constant 0 : index
    %c0_17 = arith.constant 0 : index
    %18 = vector.load %arg7[%c0_15, %c0_16, %c0_17] : memref<2x16x128xf32, #tpu.memory_space<vmem>>, vector<1x16x128xf32>
    %19 = vector.shape_cast %18 : vector<1x16x128xf32> to vector<16x128xf32>
    %20 = vector.shape_cast %17 : vector<16x128xf32> to vector<1x16x128xf32>
    tpu.vector_store %arg7[%c0_15, %c0_16, %c0_17], %20 {strides = array<i32>} : memref<2x16x128xf32, #tpu.memory_space<vmem>>, vector<1x16x128xf32>,
    %21 = vector.extract_strided_slice %16 {offsets = [16, 0], sizes = [16, 128], strides = [1, 1]} : vector<32x128xf32> to vector<16x128xf32>
    %c1 = arith.constant 1 : index
    %c0_18 = arith.constant 0 : index
    %c0_19 = arith.constant 0 : index
    %22 = vector.load %arg7[%c1, %c0_18, %c0_19] : memref<2x16x128xf32, #tpu.memory_space<vmem>>, vector<1x16x128xf32>
    %23 = vector.shape_cast %22 : vector<1x16x128xf32> to vector<16x128xf32>
    %24 = vector.shape_cast %21 : vector<16x128xf32> to vector<1x16x128xf32>
    tpu.vector_store %arg7[%c1, %c0_18, %c0_19], %24 {strides = array<i32>} : memref<2x16x128xf32, #tpu.memory_space<vmem>>, vector<1x16x128xf32>,
    return
  }
  func.func @transform_0(%arg0: i32, %arg1: i32) -> (i32, i32) {
    %c0_i32 = arith.constant 0 : i32
    %c0_i32_0 = arith.constant 0 : i32
    return %c0_i32, %arg0 : i32, i32
  }
  func.func @transform_1(%arg0: i32, %arg1: i32) -> (i32, i32) {
    %c0_i32 = arith.constant 0 : i32
    %c0_i32_0 = arith.constant 0 : i32
    return %arg1, %c0_i32 : i32, i32
  }
  func.func @transform_2(%arg0: i32, %arg1: i32) -> (i32, i32) {
    %c0_i32 = arith.constant 0 : i32
    %c0_i32_0 = arith.constant 0 : i32
    return %arg1, %c0_i32 : i32, i32
  }
  func.func @transform_3(%arg0: i32, %arg1: i32) -> (i32, i32) {
    %c0_i32 = arith.constant 0 : i32
    %c0_i32_0 = arith.constant 0 : i32
    %c0_i32_1 = arith.constant 0 : i32
    return %c0_i32, %c0_i32_0 : i32, i32
  }
  func.func @transform_4(%arg0: i32, %arg1: i32) -> (i32, i32) {
    %c0_i32 = arith.constant 0 : i32
    %c0_i32_0 = arith.constant 0 : i32
    %c0_i32_1 = arith.constant 0 : i32
    return %c0_i32, %c0_i32_0 : i32, i32
  }
  func.func @transform_5(%arg0: i32, %arg1: i32) -> (i32, i32, i32) {
    %c0_i32 = arith.constant 0 : i32
    %c0_i32_0 = arith.constant 0 : i32
    return %arg0, %arg1, %c0_i32 : i32, i32, i32
  }
}

</mosaic_0001>

<llo_original>
// kernel: tpu_custom_call.1
$region0: #{tpu_custom_call.1}
  #allocation0 [shape = 'u32[]', space=smem, size = 0x4, offset = 0x4, fixed_abs, tag = 'smem constant byte address 0x4 - core index']
  #allocation1 [shape = 'u32[144,128]{1,0:T(1,128)}', space=vmem, size = 0x12000, scoped, tag = 'internal scratch']
  #allocation2 [shape = 'bf16[32,128]{1,0:T(8,128)(2,1)}', space=vmem, size = 0x2000, scoped, tag = 'scratch operand']
  %s0 = inlined_call_operand.vmem [shape: bf16[16,256], index: 0, kind: input, shape index: {}]
  %s1 = inlined_call_operand.hbm [shape: bf16[16,16], index: 1, kind: input, shape index: {}]
  %s2 = inlined_call_operand.vmem [shape: f32[16,1], index: 2, kind: input, shape index: {}]
  %s3 = inlined_call_operand.hbm [shape: bf16[128,128], index: 3, kind: input, shape index: {}]
  %s4 = inlined_call_operand.vmem [shape: f32[1,128], index: 4, kind: input, shape index: {}]
  %s5 = inlined_call_operand.hbm [shape: f32[2,16,128], index: 5, kind: output, shape index: {}]
  %s6 = sld [smem:[#allocation0]]
  $region38: #{tpu_custom_call.1} parent=0
    _
  %s8 = ssub.s32 1, %s6
  %s9 = scalar_select 0, %s8, %s6
  $region1: #{tpu_custom_call.1} parent=0
    #allocation3 [shape = 'u8[4096]{0}', space=vmem, size = 0x1000, scoped, tag = 'input window, operand 1, single buffered']
    #allocation4 [shape = 's32[1]{0}', space=sflag, size = 0x4, scoped, tag = 'scoped memory for tpu_custom_call.1']
    #allocation5 [shape = 's32[1]{0}', space=sflag, size = 0x4, scoped, tag = 'scoped memory for tpu_custom_call.1']
    #allocation6 [shape = 'u8[32768]{0}', space=vmem, size = 0x8000, scoped, tag = 'input window, operand 3, single buffered']
    #allocation7 [shape = 's32[1]{0}', space=sflag, size = 0x4, scoped, tag = 'scoped memory for tpu_custom_call.1']
    #allocation8 [shape = 'u8[16384]{0}', space=vmem, size = 0x4000, scoped, tag = 'output window, operand 0, single buffered']
    %10 = vsyncpa [#allocation4], 0
    %11 = vsyncpa [#allocation7], 0
    %12 = vsyncpa [#allocation5], 0
    // Predicated region
    $region2: #{tpu_custom_call.1} parent=1 // pred_check
      _
    $region3: #{tpu_custom_call.1} parent=1 // pred_check_branch
      %14 = sbr.rel (0) target = $region5
    $region4: #{tpu_custom_call.1} parent=1 // pred_region
      _
    $region5: #{tpu_custom_call.1} parent=1 // pred_fallthru
      _
    // Predicated region
    $region6: #{tpu_custom_call.1} parent=1 // pred_check
      _
    $region7: #{tpu_custom_call.1} parent=1 // pred_check_branch
      %16 = sbr.rel (0) target = $region9
    $region8: #{tpu_custom_call.1} parent=1 // pred_region
      %s18 = ssub.s32 128, 128
      %19 = vsyncadd [#allocation4], %s18
      %s20 = sshll.u32 [#allocation3], 4
      %s21 = int_to_ptr.vmem [resolvable:$true] %s20
      %26 = dma.hbm_to_vmem [thread:$0]  %s1, 128, %s21, [#allocation4], 64, 64, 4
    $region9: #{tpu_custom_call.1} parent=1 // pred_fallthru
      _
    // Predicated region
    $region10: #{tpu_custom_call.1} parent=1 // pred_check
      _
    $region11: #{tpu_custom_call.1} parent=1 // pred_check_branch
      %28 = sbr.rel (0) target = $region13
    $region12: #{tpu_custom_call.1} parent=1 // pred_region
      _
    $region13: #{tpu_custom_call.1} parent=1 // pred_fallthru
      _
    // Predicated region
    $region14: #{tpu_custom_call.1} parent=1 // pred_check
      _
    $region15: #{tpu_custom_call.1} parent=1 // pred_check_branch
      %30 = sbr.rel (0) target = $region17
    $region16: #{tpu_custom_call.1} parent=1 // pred_region
      %s32 = ssub.s32 1024, 1024
      %33 = vsyncadd [#allocation7], %s32
      %s34 = sshll.u32 [#allocation6], 4
      %s35 = int_to_ptr.vmem [resolvable:$true] %s34
      %40 = dma.hbm_to_vmem [thread:$0]  %s3, 1024, %s35, [#allocation7], 64, 64, 4
    $region17: #{tpu_custom_call.1} parent=1 // pred_fallthru
      _
    // Predicated region
    $region18: #{tpu_custom_call.1} parent=1 // pred_check
      _
    $region19: #{tpu_custom_call.1} parent=1 // pred_check_branch
      %42 = sbr.rel (0) target = $region21
    $region20: #{tpu_custom_call.1} parent=1 // pred_region
      _
    $region21: #{tpu_custom_call.1} parent=1 // pred_fallthru
      _
    // Predicated region
    $region22: #{tpu_custom_call.1} parent=1 // pred_check
      _
    $region23: #{tpu_custom_call.1} parent=1 // pred_check_branch
      %44 = sbr.rel (0) target = $region25
    $region24: #{tpu_custom_call.1} parent=1 // pred_region
      %45 = dma.done [#allocation4], 128
    $region25: #{tpu_custom_call.1} parent=1 // pred_fallthru
      _
    // Predicated region
    $region26: #{tpu_custom_call.1} parent=1 // pred_check
      _
    $region27: #{tpu_custom_call.1} parent=1 // pred_check_branch
      %47 = sbr.rel (0) target = $region29
    $region28: #{tpu_custom_call.1} parent=1 // pred_region
      %48 = dma.done [#allocation7], 1024
    $region29: #{tpu_custom_call.1} parent=1 // pred_fallthru
      _
    %v50 = vld [vmem:[#allocation3] sm:$0xf]
    %v51 = vld [vmem:[#allocation3 + $0x4] sm:$0xf]
    %v52 = vld [vmem:[%s0] sm:$0xff]
    %v53 = vld [vmem:[%s0 + $0x8] sm:$0xff]
    %v54 = vld [vmem:[%s2] sm:$0xff]
    %v55 = vld [vmem:[%s2 + $0x8] sm:$0xff]
    %57 = vset.pattern.permute.xlu0 0
    %58 = vperm.xlu0 %57, %v54
    %v59 = vpop.permute.xlu0 %58
    %62 = vset.pattern.permute.xlu0 0
    %63 = vperm.xlu0 %62, %v55
    %v64 = vpop.permute.xlu0 %63
    %v68 = vunpack.c.l.b16 %v50
    %v69 = vunpack.c.l.b16 %v51
    %v70 = vpack.c.b16 %v69, %v68
    %v73 = vunpack.c.l.b16 %v52
    %v74 = vunpack.c.h.b16 %v52
    %v75 = vunpack.c.l.b16 %v53
    %v76 = vunpack.c.h.b16 %v53
    %v77 = vpack.c.b16 %v75, %v73
    %v78 = vpack.c.b16 %v76, %v74
    %vm81 = vcmask 130048
    %v83 = vsel %vm81, %v70, 0
    %85 = vmatprep.subr.bf16.mxu0 0
    %86 = vmatpush1.bf16.msra.mxu0 0
    %87 = vmatprep.subr.bf16.mxu0 0
    %88 = vmatpush1.bf16.msra.mxu0 0
    %89 = vmatprep.subr.bf16.mxu0 0
    %90 = vmatpush1.bf16.msra.mxu0 0
    %91 = vmatprep.subr.bf16.mxu0 0
    %92 = vmatpush1.bf16.msra.mxu0 0
    %93 = vmatprep.subr.bf16.mxu0 0
    %94 = vmatpush1.bf16.msra.mxu0 0
    %95 = vmatprep.subr.bf16.mxu0 0
    %96 = vmatpush1.bf16.msra.mxu0 0
    %97 = vmatprep.subr.bf16.mxu0 0
    %98 = vmatpush1.bf16.msra.mxu0 0
    %99 = vmatprep.subr.bf16.mxu0 %v78
    %100 = vmatpush1.bf16.msra.mxu0 %v77
    %101 = vmatprep.subr.bf16.mxu0 0
    %102 = vmatpush2.bf16.msra.mxu0 0
    %103 = vmatprep.subr.bf16.mxu0 0
    %104 = vmatpush2.bf16.msra.mxu0 0
    %105 = vmatprep.subr.bf16.mxu0 0
    %106 = vmatpush2.bf16.msra.mxu0 0
    %107 = vmatprep.subr.bf16.mxu0 0
    %108 = vmatpush2.bf16.msra.mxu0 0
    %109 = vmatprep.subr.bf16.mxu0 0
    %110 = vmatpush2.bf16.msra.mxu0 0
    %111 = vmatprep.subr.bf16.mxu0 0
    %112 = vmatpush2.bf16.msra.mxu0 0
    %113 = vmatprep.subr.bf16.mxu0 0
    %114 = vmatpush2.bf16.msra.mxu0 0
    %115 = vmatprep.subr.bf16.mxu0 0
    %116 = vmatpush2.bf16.msra.mxu0 0
    %117 = vmatprep.mubr.bf16.mxu0 0
    %118 = vmatmul.mubr.bf16.gmra.mxu0 %v83
    %v119 = vpop.f32.mrf.mxu0
    %v120 = vadd.f32 %v59, %v119
    %v121 = vpop.f32.mrf.mxu0
    %v122 = vadd.f32 %v59, %v121
    %v123 = vpop.f32.mrf.mxu0
    %v124 = vadd.f32 %v64, %v123
    %v125 = vpop.f32.mrf.mxu0
    %v126 = vadd.f32 %v64, %v125
    %127 = vdwg.mxu0
    %v128 = vpack.c.bf16 %v124, %v120
    %v129 = vpack.c.bf16 %v126, %v122
    %v131 = vunpack.c.l.b16 %v128
    %v132 = vunpack.c.h.b16 %v128
    %v133 = vpack.c.b16 %v131, %v131
    %v134 = vpack.c.b16 %v132, %v132
    %137 = vst [vmem:[#allocation2] sm:$0xf] %v133
    %138 = vst [vmem:[#allocation2 + $0x4] sm:$0xf] %v134
    %v140 = vunpack.c.l.b16 %v129
    %v141 = vunpack.c.h.b16 %v129
    %v142 = vpack.c.b16 %v140, %v140
    %v143 = vpack.c.b16 %v141, %v141
    %146 = vst [vmem:[#allocation2 + $0x8] sm:$0xf] %v142
    %147 = vst [vmem:[#allocation2 + $0xc] sm:$0xf] %v143
    %v148 = vld [vmem:[#allocation2] sm:$0xf]
    %v149 = vld [vmem:[#allocation2 + $0x4] sm:$0xf]
    %v150 = vld [vmem:[#allocation2 + $0x8] sm:$0xf]
    %v151 = vld [vmem:[#allocation2 + $0xc] sm:$0xf]
    %v152 = vld [vmem:[#allocation6] sm:$0xf]
    %v153 = vld [vmem:[#allocation6 + $0x4] sm:$0xf]
    %v154 = vld [vmem:[#allocation6 + $0x8] sm:$0xf]
    %v155 = vld [vmem:[#allocation6 + $0xc] sm:$0xf]
    %v156 = vld [vmem:[#allocation6 + $0x10] sm:$0xf]
    %v157 = vld [vmem:[#allocation6 + $0x14] sm:$0xf]
    %v158 = vld [vmem:[#allocation6 + $0x18] sm:$0xf]
    %v159 = vld [vmem:[#allocation6 + $0x1c] sm:$0xf]
    %v160 = vld [vmem:[#allocation6 + $0x20] sm:$0xf]
    %v161 = vld [vmem:[#allocation6 + $0x24] sm:$0xf]
    %v162 = vld [vmem:[#allocation6 + $0x28] sm:$0xf]
    %v163 = vld [vmem:[#allocation6 + $0x2c] sm:$0xf]
    %v164 = vld [vmem:[#allocation6 + $0x30] sm:$0xf]
    %v165 = vld [vmem:[#allocation6 + $0x34] sm:$0xf]
    %v166 = vld [vmem:[#allocation6 + $0x38] sm:$0xf]
    %v167 = vld [vmem:[#allocation6 + $0x3c] sm:$0xf]
    %v168 = vld [vmem:[%s4] sm:$0x1]
    %v170 = vlaneseq
    %v171 = vshrl.u32 %v170, 7
    %v172 = vsub.s32 0, %v171
    %v173 = vrot.slane %v168, %v172
    %v179 = vunpack.c.l.b16 %v148
    %v180 = vunpack.c.l.b16 %v149
    %v181 = vunpack.c.l.b16 %v150
    %v182 = vunpack.c.l.b16 %v151
    %v183 = vpack.c.b16 %v180, %v179
    %v184 = vpack.c.b16 %v182, %v181
    %v203 = vunpack.c.l.b16 %v152
    %v204 = vunpack.c.l.b16 %v153
    %v205 = vunpack.c.l.b16 %v154
    %v206 = vunpack.c.l.b16 %v155
    %v207 = vunpack.c.l.b16 %v156
    %v208 = vunpack.c.l.b16 %v157
    %v209 = vunpack.c.l.b16 %v158
    %v210 = vunpack.c.l.b16 %v159
    %v211 = vunpack.c.l.b16 %v160
    %v212 = vunpack.c.l.b16 %v161
    %v213 = vunpack.c.l.b16 %v162
    %v214 = vunpack.c.l.b16 %v163
    %v215 = vunpack.c.l.b16 %v164
    %v216 = vunpack.c.l.b16 %v165
    %v217 = vunpack.c.l.b16 %v166
    %v218 = vunpack.c.l.b16 %v167
    %v219 = vpack.c.b16 %v204, %v203
    %v220 = vpack.c.b16 %v206, %v205
    %v221 = vpack.c.b16 %v208, %v207
    %v222 = vpack.c.b16 %v210, %v209
    %v223 = vpack.c.b16 %v212, %v211
    %v224 = vpack.c.b16 %v214, %v213
    %v225 = vpack.c.b16 %v216, %v215
    %v226 = vpack.c.b16 %v218, %v217
    %235 = vmatprep.subr.bf16.mxu0 0
    %236 = vmatpush1.bf16.msra.mxu0 %v226
    %237 = vmatprep.subr.bf16.mxu0 0
    %238 = vmatpush1.bf16.msra.mxu0 %v225
    %239 = vmatprep.subr.bf16.mxu0 0
    %240 = vmatpush1.bf16.msra.mxu0 %v224
    %241 = vmatprep.subr.bf16.mxu0 0
    %242 = vmatpush1.bf16.msra.mxu0 %v223
    %243 = vmatprep.subr.bf16.mxu0 0
    %244 = vmatpush1.bf16.msra.mxu0 %v222
    %245 = vmatprep.subr.bf16.mxu0 0
    %246 = vmatpush1.bf16.msra.mxu0 %v221
    %247 = vmatprep.subr.bf16.mxu0 0
    %248 = vmatpush1.bf16.msra.mxu0 %v220
    %249 = vmatprep.subr.bf16.mxu0 0
    %250 = vmatpush1.bf16.msra.mxu0 %v219
    %251 = vmatprep.subr.bf16.mxu0 0
    %252 = vmatpush2.bf16.msra.mxu0 0
    %253 = vmatprep.subr.bf16.mxu0 0
    %254 = vmatpush2.bf16.msra.mxu0 0
    %255 = vmatprep.subr.bf16.mxu0 0
    %256 = vmatpush2.bf16.msra.mxu0 0
    %257 = vmatprep.subr.bf16.mxu0 0
    %258 = vmatpush2.bf16.msra.mxu0 0
    %259 = vmatprep.subr.bf16.mxu0 0
    %260 = vmatpush2.bf16.msra.mxu0 0
    %261 = vmatprep.subr.bf16.mxu0 0
    %262 = vmatpush2.bf16.msra.mxu0 0
    %263 = vmatprep.subr.bf16.mxu0 0
    %264 = vmatpush2.bf16.msra.mxu0 0
    %265 = vmatprep.subr.bf16.mxu0 0
    %266 = vmatpush2.bf16.msra.mxu0 0
    %267 = vmatprep.mubr.bf16.mxu0 0
    %268 = vmatmul.mubr.bf16.gmra.mxu0 %v183
    %v269 = vpop.f32.mrf.mxu0
    %v270 = vadd.f32 %v173, %v269
    %v271 = vpop.f32.mrf.mxu0
    %v272 = vpop.f32.mrf.mxu0
    %v273 = vadd.f32 %v173, %v272
    %v274 = vpop.f32.mrf.mxu0
    %275 = vmatprep.mubr.bf16.mxu0 0
    %276 = vmatmul.mubr.bf16.gmra.mxu0 %v184
    %v277 = vpop.f32.mrf.mxu0
    %v278 = vadd.f32 %v173, %v277
    %v279 = vpop.f32.mrf.mxu0
    %v280 = vpop.f32.mrf.mxu0
    %v281 = vadd.f32 %v173, %v280
    %v282 = vpop.f32.mrf.mxu0
    %283 = vdwg.mxu0
    %284 = vst [vmem:[#allocation8] sm:$0xff] %v270
    %285 = vst [vmem:[#allocation8 + $0x8] sm:$0xff] %v273
    %s286 = scalar_lea.vmem [#allocation8], 16
    %287 = vst [vmem:[%s286] sm:$0xff] %v278
    %288 = vst [vmem:[%s286 + $0x8] sm:$0xff] %v281
    // Predicated region
    $region30: #{tpu_custom_call.1} parent=1 // pred_check
      _
    $region31: #{tpu_custom_call.1} parent=1 // pred_check_branch
      %290 = sbr.rel (0) target = $region33
    $region32: #{tpu_custom_call.1} parent=1 // pred_region
      %s292 = ssub.s32 512, 512
      %293 = vsyncadd [#allocation5], %s292
      %s294 = sshll.u32 [#allocation8], 4
      %s295 = int_to_ptr.vmem [resolvable:$true] %s294
      %300 = dma.vmem_to_hbm [thread:$0]  %s295, 512, %s5, [#allocation5], 128, 128, 8
    $region33: #{tpu_custom_call.1} parent=1 // pred_fallthru
      _
    // Predicated region
    $region34: #{tpu_custom_call.1} parent=1 // pred_check
      _
    $region35: #{tpu_custom_call.1} parent=1 // pred_check_branch
      %302 = sbr.rel (0) target = $region37
    $region36: #{tpu_custom_call.1} parent=1 // pred_region
      %303 = dma.done [#allocation5], 512
    $region37: #{tpu_custom_call.1} parent=1 // pred_fallthru
      _
    %304 = vsyncpa [#allocation4], 1
    %305 = vsyncpa [#allocation7], 1
    %306 = vsyncpa [#allocation5], 1

</llo_original>
